<compile_context>
chip_gen: v6e
topology: v6e:2x2x1
jax: 0.10.0
libtpu: 0.0.40
codegen_flags: <defaults>
</compile_context>

<pallas_src>
import functools

import jax
import jax.numpy as jnp
from jax import lax
from jax.experimental import pallas as pl
from jax.experimental.pallas import tpu as pltpu


def _round_up(x, m):
    return (x + m - 1) // m * m


def _vmem_capacity_bytes():
    try:
        return int(pltpu.get_tpu_info().vmem_capacity_bytes)
    except Exception:
        return 64 << 20          # conservative (v7x-sized) fallback


def _soft_mask_bce_kernel(pred_ref, tgt_ref, mask_ref, out_ref, acc_ref, *,
                          smooth, seq_len, lane_tile, ragged):
    """Grid = (batch_blocks, lane_blocks); the lane-block axis is the reduction
    axis. Per step: elementwise BCE on a (bn, C, ts) tile, mask applied, then a
    pure-VPU fold of ts lanes down to 128 lanes accumulated into a tiny
    (bn, C, 128) scratch. Lane-dense partials are written once per batch-block;
    the final cross-lane sum / channel weight / mean happen in the wrapper."""
    j = pl.program_id(1)

    @pl.when(j == 0)
    def _():
        acc_ref[...] = jnp.zeros_like(acc_ref)

    x = pred_ref[...].astype(jnp.float32)       # (bn, C, ts)
    z = tgt_ref[...].astype(jnp.float32)        # (bn, C, ts)
    m = mask_ref[...].astype(jnp.float32)       # (bn, 1, ts)

    if ragged:
        # Last lane-block is ragged (no wrapper padding): zero out-of-range
        # lanes BEFORE the exp/log1p so garbage tail data can't inject NaN/Inf.
        lane = lax.broadcasted_iota(jnp.int32, x.shape, 2)
        valid = (j * lane_tile + lane) < seq_len
        x = jnp.where(valid, x, 0.0)
        z = jnp.where(valid, z, 0.0)
        lane_m = lax.broadcasted_iota(jnp.int32, m.shape, 2)
        m = jnp.where((j * lane_tile + lane_m) < seq_len, m, 0.0)

    if smooth is not None:
        off, scale = smooth                      # folded: sf + z * (1 - 2*sf)
        z = off + z * scale

    # numerically stable BCE with logits: max(x,0) - x*z + log(1 + exp(-|x|))
    loss = jnp.maximum(x, 0.0) - x * z + jnp.log1p(jnp.exp(-jnp.abs(x)))
    masked = m * loss                            # mask broadcast over C (VPU)

    # Fold lanes ts -> 128 with lane-tile-aligned slices (pure VPU, no XLU,
    # accumulator stays vreg-resident inside the step).
    part = masked[:, :, 0:128]
    for t in range(1, lane_tile // 128):
        part = part + masked[:, :, t * 128:(t + 1) * 128]
    acc_ref[...] += part

    @pl.when(j == pl.num_programs(1) - 1)
    def _():
        out_ref[...] = acc_ref[...]              # lane-dense (128-wide) store


def _choose_tiles(N, C, S, in_itemsize, mask_itemsize, vmem_cap):
    """Pick (batch_block, lane_tile). Lane tile targets ~4 MiB per streamed
    input buffer; the total double-buffered plan is capped at ~45% of the
    chip's physical VMEM. Batch-block search keeps >= 2 batch-blocks so the
    'parallel' axis can be sharded across both v7x TensorCores."""
    s128 = _round_up(max(S, 1), 128)
    sub_in = 8 * max(1, 4 // in_itemsize)
    sub_m = 8 * max(1, 4 // mask_itemsize)

    plan_budget = min(int(vmem_cap * 0.45), 40 << 20)
    target_buf = 4 << 20

    def plan_bytes(bn, ts):
        b = 2 * 2 * bn * _round_up(C, sub_in) * ts * in_itemsize   # pred+tgt (dbuf)
        b += 2 * bn * _round_up(1, sub_m) * ts * mask_itemsize     # mask (dbuf)
        b += 3 * bn * _round_up(C, 8) * 128 * 4                    # acc + out (dbuf)
        return b

    divisors = [d for d in range(1, N + 1) if N % d == 0]
    cands = [d for d in divisors if N // d >= 2] or divisors
    for bn in sorted(cands, reverse=True):
        ts = (target_buf // max(1, bn * C * in_itemsize)) // 128 * 128
        ts = min(s128, max(128, ts))
        while ts > 128 and plan_bytes(bn, ts) > plan_budget:
            ts -= 128
        if plan_bytes(bn, ts) <= plan_budget:
            return bn, ts
    return 1, 128


def soft_mask_binary_cross_entropy(pred, target, mask, channel_weight=None,
                                   smooth_factor=None):
    """SoftMaskBinaryCrossEntropy forward.

    pred/target: (N, C, W, H); mask: (N, W, H); channel_weight: (C,) or None.
    Inputs are streamed in their native dtype (bf16 callers get ~halved HBM
    traffic); all accumulation is f32 inside the kernel."""
    N, C, W, H = pred.shape
    S = W * H

    pred2 = pred.reshape(N, C, S)            # contiguous reshapes: free in HBM
    tgt2 = target.reshape(N, C, S)
    mask2 = mask.reshape(N, 1, S)

    vmem_cap = _vmem_capacity_bytes()
    bn, ts = _choose_tiles(N, C, S, pred2.dtype.itemsize,
                           mask2.dtype.itemsize, vmem_cap)
    num_lane_blocks = pl.cdiv(S, ts)
    ragged = (S % ts) != 0

    smooth = None
    if smooth_factor is not None:
        sf = float(smooth_factor)
        smooth = (sf, 1.0 - 2.0 * sf)

    kernel = functools.partial(_soft_mask_bce_kernel, smooth=smooth,
                               seq_len=S, lane_tile=ts, ragged=ragged)

    # Chip-aware VMEM ceiling: 40 MiB on 64 MiB chips (v7x), 96 MiB on 128 MiB
    # chips (v5e/v6e) so the ~4 MiB double-buffered tiles never spill.
    vmem_limit = (40 << 20) if vmem_cap <= (64 << 20) else (96 << 20)

    partials = pl.pallas_call(
        kernel,
        out_shape=jax.ShapeDtypeStruct((N, C, 128), jnp.float32),
        grid_spec=pltpu.PrefetchScalarGridSpec(
            num_scalar_prefetch=0,
            grid=(N // bn, num_lane_blocks),
            in_specs=[
                pl.BlockSpec((bn, C, ts), lambda i, j: (i, 0, j)),
                pl.BlockSpec((bn, C, ts), lambda i, j: (i, 0, j)),
                pl.BlockSpec((bn, 1, ts), lambda i, j: (i, 0, j)),
            ],
            out_specs=pl.BlockSpec((bn, C, 128), lambda i, j: (i, 0, 0)),
            scratch_shapes=[pltpu.VMEM((bn, C, 128), jnp.float32)],
        ),
        compiler_params=pltpu.CompilerParams(
            dimension_semantics=("parallel", "arbitrary"),
            vmem_limit_bytes=vmem_limit,
        ),
    )(pred2, tgt2, mask2)

    per_nc = jnp.sum(partials, axis=-1)                       # (N, C)
    if channel_weight is not None:
        cw = jnp.asarray(channel_weight, dtype=jnp.float32).reshape(1, C)
        per_nc = per_nc * cw                                  # epilogue weighting
    return jnp.sum(per_nc) / jnp.float32(N * C * W * H)


def _reference(pred, target, mask, channel_weight, smooth_factor):
    N, C, W, H = pred.shape
    weight = jnp.broadcast_to(mask[:, None], (N, C, W, H)).astype(jnp.float32)
    if channel_weight is not None:
        weight = weight * jnp.asarray(channel_weight,
                                      dtype=jnp.float32).reshape(-1, 1, 1)
    z = target.astype(jnp.float32)
    if smooth_factor is not None:
        z = (1 - z) * smooth_factor + z * (1 - smooth_factor)
    x = pred.astype(jnp.float32)
    loss = jnp.maximum(x, 0.0) - x * z + jnp.log1p(jnp.exp(-jnp.abs(x)))
    return jnp.mean(weight * loss)


if __name__ == "__main__":
    key = jax.random.PRNGKey(0)
    k1, k2, k3 = jax.random.split(key, 3)

    N, C, W, H = 2, 4, 16, 16
    pred = jax.random.normal(k1, (N, C, W, H), dtype=jnp.float32)
    target = (jax.random.uniform(k2, (N, C, W, H)) > 0.5).astype(jnp.float32)
    mask = (jax.random.uniform(k3, (N, W, H)) > 0.3).astype(jnp.float32)

    # the module's optional per-channel `weight`, shape (C,)
    channel_weight = jnp.array([1.0, 0.5, 2.0, 1.5], dtype=jnp.float32)
    smooth_factor = 0.1

    loss = soft_mask_binary_cross_entropy(
        pred, target, mask,
        channel_weight=channel_weight,
        smooth_factor=smooth_factor,
    )
    loss = jax.block_until_ready(loss)

    ref = _reference(pred, target, mask, channel_weight, smooth_factor)
    assert jnp.allclose(loss, ref, rtol=1e-5, atol=1e-5), (loss, ref)

    print("KERNEL_OK")
</pallas_src>

<mosaic_0001>
module attributes {stable_mosaic.version = 11 : i64} {
  func.func @_soft_mask_bce_kernel(%arg0: i32, %arg1: i32, %arg2: memref<1x4x256xf32, #tpu.memory_space<vmem>>, %arg3: memref<1x4x256xf32, #tpu.memory_space<vmem>>, %arg4: memref<1x1x256xf32, #tpu.memory_space<vmem>>, %arg5: memref<1x4x128xf32, #tpu.memory_space<vmem>>, %arg6: memref<1x4x128xf32, #tpu.memory_space<vmem>>) attributes {dimension_semantics = [#tpu.dimension_semantics<parallel>, #tpu.dimension_semantics<arbitrary>], iteration_bounds = array<i64: 2, 1>, scalar_prefetch = 0 : i64, scratch_operands = 1 : i64, tpu.core_type = #tpu.core_type<tc>, window_params = [{transform_indices = @transform_0, window_bounds = array<i64: 1, 4, 256>}, {transform_indices = @transform_1, window_bounds = array<i64: 1, 4, 256>}, {transform_indices = @transform_2, window_bounds = array<i64: 1, 1, 256>}, {transform_indices = @transform_3, window_bounds = array<i64: 1, 4, 128>}]} {
    %c0_i32 = arith.constant 0 : i32
    %0 = arith.cmpi eq, %arg1, %c0_i32 : i32
    %1 = arith.extui %0 : i1 to i32
    %c0_i32_0 = arith.constant 0 : i32
    %2 = arith.cmpi ne, %1, %c0_i32_0 : i32
    scf.if %2 {
      %cst_20 = arith.constant 0.000000e+00 : f32
      %31 = vector.broadcast %cst_20 : f32 to vector<1x4x128xf32>
      %c0_21 = arith.constant 0 : index
      %c0_22 = arith.constant 0 : index
      %c0_23 = arith.constant 0 : index
      %32 = vector.load %arg6[%c0_21, %c0_22, %c0_23] : memref<1x4x128xf32, #tpu.memory_space<vmem>>, vector<1x4x128xf32>
      tpu.vector_store %arg6[%c0_21, %c0_22, %c0_23], %31 {strides = array<i32>} : memref<1x4x128xf32, #tpu.memory_space<vmem>>, vector<1x4x128xf32>,
    } else {
    }
    %c0 = arith.constant 0 : index
    %c0_1 = arith.constant 0 : index
    %c0_2 = arith.constant 0 : index
    %3 = vector.load %arg2[%c0, %c0_1, %c0_2] : memref<1x4x256xf32, #tpu.memory_space<vmem>>, vector<1x4x256xf32>
    %c0_3 = arith.constant 0 : index
    %c0_4 = arith.constant 0 : index
    %c0_5 = arith.constant 0 : index
    %4 = vector.load %arg3[%c0_3, %c0_4, %c0_5] : memref<1x4x256xf32, #tpu.memory_space<vmem>>, vector<1x4x256xf32>
    %c0_6 = arith.constant 0 : index
    %c0_7 = arith.constant 0 : index
    %c0_8 = arith.constant 0 : index
    %5 = vector.load %arg4[%c0_6, %c0_7, %c0_8] : memref<1x1x256xf32, #tpu.memory_space<vmem>>, vector<1x1x256xf32>
    %cst = arith.constant 8.000000e-01 : f32
    %6 = vector.broadcast %cst : f32 to vector<1x4x256xf32>
    %7 = arith.mulf %4, %6 : vector<1x4x256xf32>
    %cst_9 = arith.constant 1.000000e-01 : f32
    %8 = vector.broadcast %cst_9 : f32 to vector<1x4x256xf32>
    %9 = arith.addf %8, %7 : vector<1x4x256xf32>
    %cst_10 = arith.constant 0.000000e+00 : f32
    %10 = vector.broadcast %cst_10 : f32 to vector<1x4x256xf32>
    %11 = arith.maximumf %3, %10 : vector<1x4x256xf32>
    %12 = arith.mulf %3, %9 : vector<1x4x256xf32>
    %13 = arith.subf %11, %12 : vector<1x4x256xf32>
    %14 = math.absf %3 : vector<1x4x256xf32>
    %cst_11 = arith.constant 0.000000e+00 : f32
    %15 = vector.broadcast %cst_11 : f32 to vector<1x4x256xf32>
    %16 = arith.subf %15, %14 : vector<1x4x256xf32>
    %17 = math.exp %16 : vector<1x4x256xf32>
    %18 = math.log1p %17 : vector<1x4x256xf32>
    %19 = arith.addf %13, %18 : vector<1x4x256xf32>
    %20 = vector.broadcast %5 : vector<1x1x256xf32> to vector<1x4x256xf32>
    %21 = arith.mulf %20, %19 : vector<1x4x256xf32>
    %22 = vector.extract_strided_slice %21 {offsets = [0, 0, 0], sizes = [1, 4, 128], strides = [1, 1, 1]} : vector<1x4x256xf32> to vector<1x4x128xf32>
    %23 = vector.extract_strided_slice %21 {offsets = [0, 0, 128], sizes = [1, 4, 128], strides = [1, 1, 1]} : vector<1x4x256xf32> to vector<1x4x128xf32>
    %24 = arith.addf %22, %23 : vector<1x4x128xf32>
    %c0_12 = arith.constant 0 : index
    %c0_13 = arith.constant 0 : index
    %c0_14 = arith.constant 0 : index
    %25 = vector.load %arg6[%c0_12, %c0_13, %c0_14] : memref<1x4x128xf32, #tpu.memory_space<vmem>>, vector<1x4x128xf32>
    %26 = arith.addf %25, %24 : vector<1x4x128xf32>
    %c0_15 = arith.constant 0 : index
    %c0_16 = arith.constant 0 : index
    %c0_17 = arith.constant 0 : index
    %27 = vector.load %arg6[%c0_15, %c0_16, %c0_17] : memref<1x4x128xf32, #tpu.memory_space<vmem>>, vector<1x4x128xf32>
    tpu.vector_store %arg6[%c0_15, %c0_16, %c0_17], %26 {strides = array<i32>} : memref<1x4x128xf32, #tpu.memory_space<vmem>>, vector<1x4x128xf32>,
    %c0_i32_18 = arith.constant 0 : i32
    %28 = arith.cmpi eq, %arg1, %c0_i32_18 : i32
    %29 = arith.extui %28 : i1 to i32
    %c0_i32_19 = arith.constant 0 : i32
    %30 = arith.cmpi ne, %29, %c0_i32_19 : i32
    scf.if %30 {
      %c0_20 = arith.constant 0 : index
      %c0_21 = arith.constant 0 : index
      %c0_22 = arith.constant 0 : index
      %31 = vector.load %arg6[%c0_20, %c0_21, %c0_22] : memref<1x4x128xf32, #tpu.memory_space<vmem>>, vector<1x4x128xf32>
      %c0_23 = arith.constant 0 : index
      %c0_24 = arith.constant 0 : index
      %c0_25 = arith.constant 0 : index
      %32 = vector.load %arg5[%c0_23, %c0_24, %c0_25] : memref<1x4x128xf32, #tpu.memory_space<vmem>>, vector<1x4x128xf32>
      tpu.vector_store %arg5[%c0_23, %c0_24, %c0_25], %31 {strides = array<i32>} : memref<1x4x128xf32, #tpu.memory_space<vmem>>, vector<1x4x128xf32>,
    } else {
    }
    return
  }
  func.func @transform_0(%arg0: i32, %arg1: i32) -> (i32, i32, i32) {
    %c0_i32 = arith.constant 0 : i32
    %c0_i32_0 = arith.constant 0 : i32
    return %arg0, %c0_i32, %arg1 : i32, i32, i32
  }
  func.func @transform_1(%arg0: i32, %arg1: i32) -> (i32, i32, i32) {
    %c0_i32 = arith.constant 0 : i32
    %c0_i32_0 = arith.constant 0 : i32
    return %arg0, %c0_i32, %arg1 : i32, i32, i32
  }
  func.func @transform_2(%arg0: i32, %arg1: i32) -> (i32, i32, i32) {
    %c0_i32 = arith.constant 0 : i32
    %c0_i32_0 = arith.constant 0 : i32
    return %arg0, %c0_i32, %arg1 : i32, i32, i32
  }
  func.func @transform_3(%arg0: i32, %arg1: i32) -> (i32, i32, i32) {
    %c0_i32 = arith.constant 0 : i32
    %c0_i32_0 = arith.constant 0 : i32
    %c0_i32_1 = arith.constant 0 : i32
    return %arg0, %c0_i32, %c0_i32_0 : i32, i32, i32
  }
}

</mosaic_0001>

<llo_original>
// kernel: tpu_custom_call.1
$region0: #{tpu_custom_call.1}
  #allocation0 [shape = 'u32[]', space=smem, size = 0x4, offset = 0x4, fixed_abs, tag = 'smem constant byte address 0x4 - core index']
  #allocation1 [shape = 'u32[144,128]{1,0:T(1,128)}', space=vmem, size = 0x12000, scoped, tag = 'internal scratch']
  #allocation2 [shape = 'f32[1,4,128]{2,1,0:T(4,128)}', space=vmem, size = 0x800, scoped, tag = 'scratch operand']
  %s0 = inlined_call_operand.hbm [shape: f32[2,4,256], index: 0, kind: input, shape index: {}]
  %s1 = inlined_call_operand.hbm [shape: f32[2,4,256], index: 1, kind: input, shape index: {}]
  %s2 = inlined_call_operand.hbm [shape: f32[2,1,256], index: 2, kind: input, shape index: {}]
  %s3 = inlined_call_operand.hbm [shape: f32[2,4,128], index: 3, kind: output, shape index: {}]
  %s4 = sld [smem:[#allocation0]]
  $region65: #{tpu_custom_call.1} parent=0
    _
  %s6 = ssub.s32 1, %s4
  %s7 = scalar_select 0, %s6, %s4
  $region1: #{tpu_custom_call.1} parent=0
    #allocation3 [shape = 'u8[8192]{0}', space=vmem, size = 0x2000, scoped, tag = 'input window, operand 0']
    #allocation4 [shape = 's32[2]{0}', space=sflag, size = 0x8, scoped, tag = 'scoped memory for tpu_custom_call.1']
    #allocation5 [shape = 's32[2]{0}', space=sflag, size = 0x8, scoped, tag = 'scoped memory for tpu_custom_call.1']
    #allocation6 [shape = 'u8[8192]{0}', space=vmem, size = 0x2000, scoped, tag = 'input window, operand 1']
    #allocation7 [shape = 's32[2]{0}', space=sflag, size = 0x8, scoped, tag = 'scoped memory for tpu_custom_call.1']
    #allocation8 [shape = 'u8[2048]{0}', space=vmem, size = 0x800, scoped, tag = 'input window, operand 2']
    #allocation9 [shape = 'u8[4096]{0}', space=vmem, size = 0x1000, scoped, tag = 'output window, operand 0']
    %8 = vsyncpa [#allocation4], 0
    %s9 = scalar_lea.sflag [#allocation4], 1
    %10 = vsyncpa %s9, 0
    %11 = vsyncpa [#allocation7], 0
    %s12 = scalar_lea.sflag [#allocation7], 1
    %13 = vsyncpa %s12, 0
    %14 = vsyncpa [#allocation5], 0
    %s15 = scalar_lea.sflag [#allocation5], 1
    %16 = vsyncpa %s15, 0
    loop: start=0, step=1, limit=4
    $region2: #{tpu_custom_call.1} parent=1 // loop_pre_header
      _
    $region3: #{tpu_custom_call.1} parent=1 // loop_header
      %s18 = sphi 0, %s22
      %p19 = scmp.ge.s32.totalorder %s18, 4
      %s25 = sphi 0, %s37
      %s26 = sphi 0, %s33
      %s27 = sphi 0, %s25
      %s28 = sphi 0, %s26
      %s29 = sphi 0, %s27
      %s30 = sphi 0, %s28
      %s42 = sphi 0, %s44
      %s45 = sphi 0, %s42
      %s46 = sphi 0, %s45
      %s62 = sphi 0, %s46
      %s70 = sphi 0, %s72
      %s73 = sphi 0, %s70
      %s74 = sphi 0, %s73
      %s90 = sphi 0, %s74
      %s98 = sphi 0, %s100
      %s101 = sphi 0, %s98
      %s102 = sphi 0, %s101
      %s118 = sphi 0, %s102
      %s124 = sphi 0, %s126
      %s127 = sphi 0, %s124
      %s128 = sphi 0, %s127
      %s144 = sphi 0, %s128
    $region4: #{tpu_custom_call.1} parent=1 // loop_header_branch
      %21 = sbr.rel (%p19) target = $region8
    $region5: #{tpu_custom_call.1} parent=1 // loop_body
      %s23 = ssub.s32 %s18, 1
      %s24 = ssub.s32 %s18, 2
      %s31 = sadd.s32 1, %s26
      %p32 = scmp.ge.s32.totalorder %s31, 1
      %s33 = scalar_select %p32, 0, %s31
      %s34 = sadd.s32 1, %s25
      %s35 = scalar_select %p32, %s34, %s25
      %p36 = scmp.ge.s32.totalorder %s35, 2
      %s37 = scalar_select %p36, 0, %s35
      %s38 = ssub.s32 %s25, %s37
      %s39 = ssub.s32 %s26, %s33
      %s40 = sor.u32 %s38, %s39
      %p41 = scmp.eq.s32.totalorder %s40, 0
      %s43 = sadd.s32 %s42, 1
      %s44 = scalar_select %p41, %s42, %s43
      %p47 = pneg %p41
      %p48 = scmp.eq.s32.totalorder %s18, 1
      %p49 = por %p47, %p48
      %p50 = scmp.ne.s32.totalorder %s42, %s45
      %p51 = scmp.eq.s32.totalorder %s18, 0
      %p52 = por %p50, %p51
      %p53 = scmp.ne.s32.totalorder %s42, %s45
      %p54 = scmp.eq.s32.totalorder %s23, 1
      %p55 = por %p53, %p54
      %p56 = scmp.ne.s32.totalorder %s45, %s46
      %p57 = scmp.eq.s32.totalorder %s23, 0
      %p58 = por %p56, %p57
      %p59 = scmp.ne.s32.totalorder %s45, %s46
      %p60 = scmp.eq.s32.totalorder %s24, 1
      %p61 = por %p59, %p60
      %p63 = scmp.ne.s32.totalorder %s46, %s62
      %p64 = scmp.eq.s32.totalorder %s24, 0
      %p65 = por %p63, %p64
      %s66 = ssub.s32 %s25, %s37
      %s67 = ssub.s32 %s26, %s33
      %s68 = sor.u32 %s66, %s67
      %p69 = scmp.eq.s32.totalorder %s68, 0
      %s71 = sadd.s32 %s70, 1
      %s72 = scalar_select %p69, %s70, %s71
      %p75 = pneg %p69
      %p76 = scmp.eq.s32.totalorder %s18, 1
      %p77 = por %p75, %p76
      %p78 = scmp.ne.s32.totalorder %s70, %s73
      %p79 = scmp.eq.s32.totalorder %s18, 0
      %p80 = por %p78, %p79
      %p81 = scmp.ne.s32.totalorder %s70, %s73
      %p82 = scmp.eq.s32.totalorder %s23, 1
      %p83 = por %p81, %p82
      %p84 = scmp.ne.s32.totalorder %s73, %s74
      %p85 = scmp.eq.s32.totalorder %s23, 0
      %p86 = por %p84, %p85
      %p87 = scmp.ne.s32.totalorder %s73, %s74
      %p88 = scmp.eq.s32.totalorder %s24, 1
      %p89 = por %p87, %p88
      %p91 = scmp.ne.s32.totalorder %s74, %s90
      %p92 = scmp.eq.s32.totalorder %s24, 0
      %p93 = por %p91, %p92
      %s94 = ssub.s32 %s25, %s37
      %s95 = ssub.s32 %s26, %s33
      %s96 = sor.u32 %s94, %s95
      %p97 = scmp.eq.s32.totalorder %s96, 0
      %s99 = sadd.s32 %s98, 1
      %s100 = scalar_select %p97, %s98, %s99
      %p103 = pneg %p97
      %p104 = scmp.eq.s32.totalorder %s18, 1
      %p105 = por %p103, %p104
      %p106 = scmp.ne.s32.totalorder %s98, %s101
      %p107 = scmp.eq.s32.totalorder %s18, 0
      %p108 = por %p106, %p107
      %p109 = scmp.ne.s32.totalorder %s98, %s101
      %p110 = scmp.eq.s32.totalorder %s23, 1
      %p111 = por %p109, %p110
      %p112 = scmp.ne.s32.totalorder %s101, %s102
      %p113 = scmp.eq.s32.totalorder %s23, 0
      %p114 = por %p112, %p113
      %p115 = scmp.ne.s32.totalorder %s101, %s102
      %p116 = scmp.eq.s32.totalorder %s24, 1
      %p117 = por %p115, %p116
      %p119 = scmp.ne.s32.totalorder %s102, %s118
      %p120 = scmp.eq.s32.totalorder %s24, 0
      %p121 = por %p119, %p120
      %s122 = ssub.s32 %s25, %s37
      %p123 = scmp.eq.s32.totalorder %s122, 0
      %s125 = sadd.s32 %s124, 1
      %s126 = scalar_select %p123, %s124, %s125
      %p129 = pneg %p123
      %p130 = scmp.eq.s32.totalorder %s18, 1
      %p131 = por %p129, %p130
      %p132 = scmp.ne.s32.totalorder %s124, %s127
      %p133 = scmp.eq.s32.totalorder %s18, 0
      %p134 = por %p132, %p133
      %p135 = scmp.ne.s32.totalorder %s124, %s127
      %p136 = scmp.eq.s32.totalorder %s23, 1
      %p137 = por %p135, %p136
      %p138 = scmp.ne.s32.totalorder %s127, %s128
      %p139 = scmp.eq.s32.totalorder %s23, 0
      %p140 = por %p138, %p139
      %p141 = scmp.ne.s32.totalorder %s127, %s128
      %p142 = scmp.eq.s32.totalorder %s24, 1
      %p143 = por %p141, %p142
      %p145 = scmp.ne.s32.totalorder %s128, %s144
      %p146 = scmp.eq.s32.totalorder %s24, 0
      %p147 = por %p145, %p146
      %p148 = scmp.le.s32.totalorder 1, %s18
      %p149 = scmp.lt.s32.totalorder %s18, 3
      %p150 = pnand %p148, %p149
      %p151 = pneg %p150
      // Predicated region
      $region9: #{tpu_custom_call.1} parent=5 // pred_check
        _
      $region10: #{tpu_custom_call.1} parent=5 // pred_check_branch
        %153 = sbr.rel (%p150) target = $region12
      $region11: #{tpu_custom_call.1} parent=5 // pred_region
        %s154 = ssub.s32 %s18, 1
      $region12: #{tpu_custom_call.1} parent=5 // pred_fallthru
        _
      %p155 = scmp.lt.s32.totalorder %s18, 2
      // Predicated region
      $region13: #{tpu_custom_call.1} parent=5 // pred_check
        %p156 = pneg %p155
      $region14: #{tpu_custom_call.1} parent=5 // pred_check_branch
        %158 = sbr.rel (%p156) target = $region16
      $region15: #{tpu_custom_call.1} parent=5 // pred_region
        // Predicated region
        $region17: #{tpu_custom_call.1} parent=15 // pred_check
          %p159 = pneg %p52
        $region18: #{tpu_custom_call.1} parent=15 // pred_check_branch
          %161 = sbr.rel (%p159) target = $region20
        $region19: #{tpu_custom_call.1} parent=15 // pred_region
          %s162 = sand.u32 %s42, 1
          %s163 = scalar_lea.sflag [#allocation4], %s162
          %s164 = sand.u32 %s42, 1
          %s165 = smul.addr %s164, 8
          %s166 = scalar_lea.vmem [#allocation3], %s165
          %s167 = smul.u32 2, %s26
          %s169 = ssub.s32 128, 128
          %170 = vsyncadd %s163, %s169
          %s171 = smul.addr %s25, 2
          %s172 = sadd.s32 %s167, %s171
          %s173 = smul.addr %s172, 64
          %s174 = scalar_lea.hbm %s0, %s173
          %s176 = sshll.u32 %s166, 4
          %s177 = int_to_ptr.vmem [resolvable:$true] %s176
          %179 = dma.hbm_to_vmem [thread:$0]  %s174, 128, %s177, %s163
        $region20: #{tpu_custom_call.1} parent=15 // pred_fallthru
          _
        // Predicated region
        $region21: #{tpu_custom_call.1} parent=15 // pred_check
          %p180 = pneg %p80
        $region22: #{tpu_custom_call.1} parent=15 // pred_check_branch
          %182 = sbr.rel (%p180) target = $region24
        $region23: #{tpu_custom_call.1} parent=15 // pred_region
          %s183 = sand.u32 %s18, 1
          %s184 = scalar_lea.sflag [#allocation7], %s183
          %s185 = sand.u32 %s70, 1
          %s186 = smul.addr %s185, 8
          %s187 = scalar_lea.vmem [#allocation6], %s186
          %s188 = smul.u32 2, %s26
          %s190 = ssub.s32 128, 128
          %191 = vsyncadd %s184, %s190
          %s192 = smul.addr %s25, 2
          %s193 = sadd.s32 %s188, %s192
          %s194 = smul.addr %s193, 64
          %s195 = scalar_lea.hbm %s1, %s194
          %s197 = sshll.u32 %s187, 4
          %s198 = int_to_ptr.vmem [resolvable:$true] %s197
          %200 = dma.hbm_to_vmem [thread:$0]  %s195, 128, %s198, %s184
        $region24: #{tpu_custom_call.1} parent=15 // pred_fallthru
          _
        // Predicated region
        $region25: #{tpu_custom_call.1} parent=15 // pred_check
          %p201 = pneg %p108
        $region26: #{tpu_custom_call.1} parent=15 // pred_check_branch
          %203 = sbr.rel (%p201) target = $region28
        $region27: #{tpu_custom_call.1} parent=15 // pred_region
          %s204 = sand.u32 %s18, 1
          %s205 = scalar_lea.sflag [#allocation7], %s204
          %s206 = sand.u32 %s98, 1
          %s207 = smul.addr %s206, 2
          %s208 = scalar_lea.vmem [#allocation8], %s207
          %s209 = smul.u32 2, %s26
          %s211 = ssub.s32 32, 32
          %212 = vsyncadd %s205, %s211
          %s213 = smul.addr %s25, 2
          %s214 = sadd.s32 %s209, %s213
          %s215 = smul.addr %s214, 16
          %s216 = scalar_lea.hbm %s2, %s215
          %s218 = sshll.u32 %s208, 4
          %s219 = int_to_ptr.vmem [resolvable:$true] %s218
          %221 = dma.hbm_to_vmem [thread:$0]  %s216, 32, %s219, %s205
        $region28: #{tpu_custom_call.1} parent=15 // pred_fallthru
          _
      $region16: #{tpu_custom_call.1} parent=5 // pred_fallthru
        _
      %p222 = scmp.le.s32.totalorder 1, %s18
      %p223 = scmp.lt.s32.totalorder %s18, 3
      %p224 = pnand %p222, %p223
      %p225 = pneg %p224
      // Predicated region
      $region29: #{tpu_custom_call.1} parent=5 // pred_check
        _
      $region30: #{tpu_custom_call.1} parent=5 // pred_check_branch
        %227 = sbr.rel (%p224) target = $region32
      $region31: #{tpu_custom_call.1} parent=5 // pred_region
        %s228 = ssub.s32 %s18, 1
        %s229 = sand.u32 %s45, 1
        %s230 = scalar_lea.sflag [#allocation4], %s229
        %s231 = sand.u32 %s45, 1
        %s232 = smul.addr %s231, 8
        %s233 = scalar_lea.vmem [#allocation3], %s232
        // Predicated region
        $region33: #{tpu_custom_call.1} parent=31 // pred_check
          %p234 = pneg %p58
        $region34: #{tpu_custom_call.1} parent=31 // pred_check_branch
          %236 = sbr.rel (%p234) target = $region36
        $region35: #{tpu_custom_call.1} parent=31 // pred_region
          %237 = dma.done %s230, 128
        $region36: #{tpu_custom_call.1} parent=31 // pred_fallthru
          _
        %s238 = sand.u32 %s23, 1
        %s239 = scalar_lea.sflag [#allocation7], %s238
        %s240 = sand.u32 %s73, 1
        %s241 = smul.addr %s240, 8
        %s242 = scalar_lea.vmem [#allocation6], %s241
        // Predicated region
        $region37: #{tpu_custom_call.1} parent=31 // pred_check
          %p243 = pneg %p86
        $region38: #{tpu_custom_call.1} parent=31 // pred_check_branch
          %245 = sbr.rel (%p243) target = $region40
        $region39: #{tpu_custom_call.1} parent=31 // pred_region
          %246 = dma.done %s239, 128
        $region40: #{tpu_custom_call.1} parent=31 // pred_fallthru
          _
        %s247 = sand.u32 %s23, 1
        %s248 = scalar_lea.sflag [#allocation7], %s247
        %s249 = sand.u32 %s101, 1
        %s250 = smul.addr %s249, 2
        %s251 = scalar_lea.vmem [#allocation8], %s250
        // Predicated region
        $region41: #{tpu_custom_call.1} parent=31 // pred_check
          %p252 = pneg %p114
        $region42: #{tpu_custom_call.1} parent=31 // pred_check_branch
          %254 = sbr.rel (%p252) target = $region44
        $region43: #{tpu_custom_call.1} parent=31 // pred_region
          %255 = dma.done %s248, 32
        $region44: #{tpu_custom_call.1} parent=31 // pred_fallthru
          _
        %s256 = sand.u32 %s45, 1
        %s257 = scalar_lea.sflag [#allocation4], %s256
        %s258 = sand.u32 %s45, 1
        %s259 = smul.addr %s258, 8
        %s260 = scalar_lea.vmem [#allocation3], %s259
        %p261 = pneg %p58
        %p262 = pneg %p55
        %s263 = sand.u32 %s23, 1
        %s264 = scalar_lea.sflag [#allocation7], %s263
        %s265 = sand.u32 %s73, 1
        %s266 = smul.addr %s265, 8
        %s267 = scalar_lea.vmem [#allocation6], %s266
        %p268 = pneg %p86
        %p269 = pneg %p83
        %s270 = sand.u32 %s23, 1
        %s271 = scalar_lea.sflag [#allocation7], %s270
        %s272 = sand.u32 %s101, 1
        %s273 = smul.addr %s272, 2
        %s274 = scalar_lea.vmem [#allocation8], %s273
        %p275 = pneg %p114
        %p276 = pneg %p111
        %p277 = pneg %p140
        %p278 = pneg %p137
        %s279 = sand.u32 %s127, 1
        %s280 = scalar_lea.sflag [#allocation5], %s279
        %s281 = sand.u32 %s127, 1
        %s282 = smul.addr %s281, 4
        %s283 = scalar_lea.vmem [#allocation9], %s282
        %s284 = smul.u32 2, %s28
        %s285 = smul.u32 2, %s28
        %s286 = smul.u32 2, %s28
        %p287 = scmp.eq.s32.totalorder %s28, 0
        // Predicated region
        $region45: #{tpu_custom_call.1} parent=31 // pred_check
          %p288 = pneg %p287
        $region46: #{tpu_custom_call.1} parent=31 // pred_check_branch
          %290 = sbr.rel (%p288) target = $region48
        $region47: #{tpu_custom_call.1} parent=31 // pred_region
          %291 = vst [vmem:[#allocation2] sm:$0xf] 0.0
        $region48: #{tpu_custom_call.1} parent=31 // pred_fallthru
          _
        %v292 = vld [vmem:[%s233] sm:$0xff]
        %v293 = vld [vmem:[%s242] sm:$0xff]
        %v294 = vld [vmem:[%s251] sm:$0x3]
        %v295 = vmul.f32 %v293, 0.8
        %v296 = vadd.f32 %v295, 0.1
        %v297 = vmax.f32 %v292, 0.0
        %v298 = vmul.f32 %v292, %v296
        %v299 = vsub.f32 %v297, %v298
        %v300 = vand.u32 2147483647, %v292
        %v301 = vsub.f32 0.0, %v300
        %v302 = vmul.f32 %v301, 1.442695
        %v303 = vpow.pop %v302
        %v304 = vadd.f32 %v303, 1.0
        %v305 = vlog2.pop %v304
        %v306 = vmul.f32 %v305, 0.6931472
        %v307 = vmul.f32 -0.5, %v303
        %v308 = vadd.f32 %v307, 1.0
        %v309 = vmul.f32 %v308, %v303
        %v310 = vand.u32 2147483647, %v303
        %vm311 = vcmp.lt.f32.partialorder %v310, 0.0004427343
        %v312 = vsel %vm311, %v309, %v306
        %v313 = vadd.f32 %v299, %v312
        %v315 = vlaneseq
        %v316 = vshrl.u32 %v315, 7
        %v317 = vsub.s32 0, %v316
        %v318 = vrot.slane %v294, %v317
        %v319 = vlaneseq
        %v320 = vshrl.u32 %v319, 7
        %v321 = vsub.s32 1, %v320
        %v322 = vrot.slane %v294, %v321
        %v326 = vcombine.high %v313, %v313
        %v328 = vmul.f32 %v318, %v313
        %v329 = vmul.f32 %v322, %v326
        %v330 = vadd.f32 %v328, %v329
        %v331 = vld [vmem:[#allocation2] sm:$0xf]
        %v332 = vadd.f32 %v331, %v330
        %333 = vst [vmem:[#allocation2] sm:$0xf] %v332
        // Predicated region
        $region49: #{tpu_custom_call.1} parent=31 // pred_check
          %p334 = pneg %p287
        $region50: #{tpu_custom_call.1} parent=31 // pred_check_branch
          %336 = sbr.rel (%p334) target = $region52
        $region51: #{tpu_custom_call.1} parent=31 // pred_region
          %v337 = vld [vmem:[#allocation2] sm:$0xf]
          %338 = vst [vmem:[%s283] sm:$0xf] %v337
        $region52: #{tpu_custom_call.1} parent=31 // pred_fallthru
          _
        %s339 = sand.u32 %s127, 1
        %s340 = scalar_lea.sflag [#allocation5], %s339
        %s341 = sand.u32 %s127, 1
        %s342 = smul.addr %s341, 4
        %s343 = scalar_lea.vmem [#allocation9], %s342
        // Predicated region
        $region53: #{tpu_custom_call.1} parent=31 // pred_check
          %p344 = pneg %p137
        $region54: #{tpu_custom_call.1} parent=31 // pred_check_branch
          %346 = sbr.rel (%p344) target = $region56
        $region55: #{tpu_custom_call.1} parent=31 // pred_region
          %s348 = ssub.s32 64, 64
          %349 = vsyncadd %s340, %s348
          %s350 = smul.addr %s27, 64
          %s351 = scalar_lea.hbm %s3, %s350
          %s353 = sshll.u32 %s343, 4
          %s354 = int_to_ptr.vmem [resolvable:$true] %s353
          %356 = dma.vmem_to_hbm [thread:$0]  %s354, 64, %s351, %s340
        $region56: #{tpu_custom_call.1} parent=31 // pred_fallthru
          _
      $region32: #{tpu_custom_call.1} parent=5 // pred_fallthru
        _
      %p357 = scmp.le.s32.totalorder 2, %s18
      // Predicated region
      $region57: #{tpu_custom_call.1} parent=5 // pred_check
        %p358 = pneg %p357
      $region58: #{tpu_custom_call.1} parent=5 // pred_check_branch
        %360 = sbr.rel (%p358) target = $region60
      $region59: #{tpu_custom_call.1} parent=5 // pred_region
        %s361 = ssub.s32 %s18, 2
        // Predicated region
        $region61: #{tpu_custom_call.1} parent=59 // pred_check
          %p362 = pneg %p143
        $region62: #{tpu_custom_call.1} parent=59 // pred_check_branch
          %364 = sbr.rel (%p362) target = $region64
        $region63: #{tpu_custom_call.1} parent=59 // pred_region
          %s365 = sand.u32 %s128, 1
          %s366 = scalar_lea.sflag [#allocation5], %s365
          %s367 = sand.u32 %s128, 1
          %s368 = smul.addr %s367, 4
          %s369 = scalar_lea.vmem [#allocation9], %s368
          %370 = dma.done %s366, 64
        $region64: #{tpu_custom_call.1} parent=59 // pred_fallthru
          _
      $region60: #{tpu_custom_call.1} parent=5 // pred_fallthru
        _
    $region6: #{tpu_custom_call.1} parent=1 // loop_footer
      %s22 = sadd.s32 1, %s18
    $region7: #{tpu_custom_call.1} parent=1 // loop_footer_branch
      %17 = sbr.rel target = $region3
    $region8: #{tpu_custom_call.1} parent=1 // loop_exit
      _
    %371 = vsyncpa [#allocation4], 1
    %s372 = scalar_lea.sflag [#allocation4], 1
    %373 = vsyncpa %s372, 1
    %374 = vsyncpa [#allocation7], 1
    %s375 = scalar_lea.sflag [#allocation7], 1
    %376 = vsyncpa %s375, 1
    %377 = vsyncpa [#allocation5], 1
    %s378 = scalar_lea.sflag [#allocation5], 1
    %379 = vsyncpa %s378, 1

</llo_original>
